<compile_context>
chip_gen: v6e
topology: v6e:2x2x1
jax: 0.10.0
libtpu: 0.0.40
codegen_flags: <defaults>
</compile_context>

<pallas_src>
import jax
import jax.numpy as jnp
from jax.experimental import pallas as pl
from jax.experimental.pallas import tpu as pltpu


def _nin_kernel(p_ref, w1_ref, b1_ref, w2_ref, b2_ref, w3_ref, b3_ref, o_ref):
    # conv_one as a GEMM over lane-packed im2col patches, then the two 1x1
    # convs as channel GEMMs.  bf16 MXU inputs, f32 accumulate / bias / ReLU,
    # bf16 store (mem-bound kernel: halve the writeback).
    y = jnp.dot(p_ref[...], w1_ref[...], preferred_element_type=jnp.float32)
    y = jnp.maximum(y + b1_ref[...], 0.0)
    y = jnp.dot(y.astype(w2_ref.dtype), w2_ref[...],
                preferred_element_type=jnp.float32)
    y = jnp.maximum(y + b2_ref[...], 0.0)
    y = jnp.dot(y.astype(w3_ref.dtype), w3_ref[...],
                preferred_element_type=jnp.float32)
    y = jnp.maximum(y + b3_ref[...], 0.0)
    o_ref[...] = y.astype(o_ref.dtype)


def _im2col_nhwc(x_nchw, kh, kw, stride, pad, dtype):
    """(N,C,H,W) -> patches (N*Ho*Wo, kh*kw*C), column order (kh, kw, c)."""
    N, C, H, W = x_nchw.shape
    x = jnp.transpose(x_nchw, (0, 2, 3, 1)).astype(dtype)          # NHWC, bf16
    x = jnp.pad(x, ((0, 0), (pad, pad), (pad, pad), (0, 0)))
    Ho = (H + 2 * pad - kh) // stride + 1
    Wo = (W + 2 * pad - kw) // stride + 1
    cols = [x[:, i:i + stride * Ho:stride, j:j + stride * Wo:stride, :]
            for i in range(kh) for j in range(kw)]
    patches = jnp.stack(cols, axis=3)                  # (N, Ho, Wo, kh*kw, C)
    return patches.reshape(N * Ho * Wo, kh * kw * C), Ho, Wo


def _round_up(v, a):
    return -(-v // a) * a


def _vmem_capacity_bytes():
    """Physical VMEM per TensorCore; conservative fallback if query fails."""
    try:
        info = pltpu.get_tpu_info()
        cap = getattr(info, "vmem_capacity_bytes", None)
        if cap:
            return int(cap)
    except Exception:
        pass
    return 64 * 1024 * 1024          # v7x-sized fallback (smallest VMEM)


def _pick_tile(m_packed, k_packed, c_packed, *, tm_max=1024):
    """Pick the packed-row tile (multiple of 128 when possible, >=16 for bf16
    sublane pairs) under a generation-aware VMEM budget, and shape the grid so
    multi-TC parts get an even split."""
    cap = _vmem_capacity_bytes()
    if cap <= 64 * 1024 * 1024:
        # v7x-class: 64 MiB VMEM per TC, 2 TCs per chip share the parallel axis
        budget, num_cores = 44 * 1024 * 1024, 2
    else:
        # v5e / v6e: 128 MiB VMEM, single TC -> grid is a serial loop
        budget, num_cores = 96 * 1024 * 1024, 1

    def vmem_bytes(t):
        tiles_in = 2 * t * k_packed * 2        # double-buffered bf16 patch tile
        tiles_out = 2 * t * c_packed * 2       # double-buffered bf16 out tile
        inter = 3 * t * c_packed * 4           # f32 intermediates between matmuls
        weights = 2 * (2 * (k_packed * c_packed + 2 * c_packed * c_packed)
                       + 3 * 4 * c_packed)     # double-buffered consts
        return tiles_in + tiles_out + inter + weights

    align = 128 if m_packed >= 128 else (16 if m_packed >= 16 else 8)
    tm = min(_round_up(m_packed, align), _round_up(tm_max, align))
    while tm > align and vmem_bytes(tm) > budget:
        tm = max(align, _round_up(tm // 2, align))

    if num_cores > 1:
        grid = pl.cdiv(m_packed, tm)
        if grid == 1 and m_packed >= 2 * 16:
            # split the single block so both TensorCores get work
            tm = _round_up(pl.cdiv(m_packed, num_cores), 16)
        elif grid % num_cores:
            # even number of steps -> equal work per core under "parallel"
            grid = _round_up(grid, num_cores)
            tm = max(align, _round_up(pl.cdiv(m_packed, grid), align))

    need = vmem_bytes(tm)
    limit = int(min(max(2 * need, 32 * 1024 * 1024), budget))
    limit = max(limit, need + (4 << 20))        # never below the actual footprint
    return tm, limit


def nin_block_forward(x, params, kernel_size, stride, padding, *,
                      tm_max=1024, channels_last=False):
    """x: (N, C_in, H, W) NCHW float32.
    Returns (N, C_out, Ho, Wo) float32 (PyTorch layout) unless channels_last."""
    w1, b1, w2, b2, w3, b3 = params
    C_out, C_in = w1.shape[0], w1.shape[1]
    kh = kw = kernel_size
    K = C_in * kh * kw
    N = x.shape[0]
    compute_dtype = jnp.bfloat16

    # im2col in NHWC order (weight is re-ordered instead of the 9x patch tensor)
    patches, Ho, Wo = _im2col_nhwc(x, kh, kw, stride, padding, compute_dtype)
    M = N * Ho * Wo

    # lane-packing factor: pack P spatial rows into the 128-wide lane dim
    P = 128 // C_out if (C_out < 128 and 128 % C_out == 0) else 1
    Kp, Cp = P * K, P * C_out

    # GEMM weights: torch (C_out, C_in, kh, kw) -> (kh, kw, C_in, C_out) flat,
    # matching the (kh, kw, c) patch column order; 1x1 convs are plain (C, C).
    w1m = jnp.transpose(w1, (2, 3, 1, 0)).reshape(K, C_out)
    w2m = w2.reshape(C_out, C_out).T
    w3m = w3.reshape(C_out, C_out).T
    if P > 1:
        eye = jnp.eye(P, dtype=w1m.dtype)
        # NOTE: block-diagonal kron inflates the 1x1-conv MXU work 4x; free
        # while HBM-bound (all gens today), revisit on v5e if it flips to
        # MXU-bound after further traffic cuts.  Do NOT pad Kp up to 256.
        w1m, w2m, w3m = (jnp.kron(eye, w) for w in (w1m, w2m, w3m))
    w1m = w1m.astype(compute_dtype)
    w2m = w2m.astype(compute_dtype)
    w3m = w3m.astype(compute_dtype)
    b1m = jnp.tile(b1.reshape(1, C_out), (1, P)).astype(jnp.float32)
    b2m = jnp.tile(b2.reshape(1, C_out), (1, P)).astype(jnp.float32)
    b3m = jnp.tile(b3.reshape(1, C_out), (1, P)).astype(jnp.float32)

    # tile / grid in packed-row units; zero-pad rows so the grid covers M exactly
    m_packed = pl.cdiv(M, P)
    tm, vmem_limit = _pick_tile(m_packed, Kp, Cp, tm_max=tm_max)
    grid = pl.cdiv(m_packed, tm)
    m_pad = grid * tm * P
    if m_pad != M:
        patches = jnp.pad(patches, ((0, m_pad - M), (0, 0)))
    patches_packed = patches.reshape(m_pad // P, Kp)    # free: rows contiguous

    out_flat = pl.pallas_call(
        _nin_kernel,
        out_shape=jax.ShapeDtypeStruct((m_pad // P, Cp), jnp.bfloat16),
        grid_spec=pltpu.PrefetchScalarGridSpec(
            num_scalar_prefetch=0,
            grid=(grid,),
            in_specs=[
                pl.BlockSpec((tm, Kp), lambda i: (i, 0)),      # packed patches
                pl.BlockSpec((Kp, Cp), lambda i: (0, 0)),      # w1 (block-diag)
                pl.BlockSpec((1, Cp), lambda i: (0, 0)),       # b1
                pl.BlockSpec((Cp, Cp), lambda i: (0, 0)),      # w2 (block-diag)
                pl.BlockSpec((1, Cp), lambda i: (0, 0)),       # b2
                pl.BlockSpec((Cp, Cp), lambda i: (0, 0)),      # w3 (block-diag)
                pl.BlockSpec((1, Cp), lambda i: (0, 0)),       # b3
            ],
            out_specs=pl.BlockSpec((tm, Cp), lambda i: (i, 0)),
        ),
        compiler_params=pltpu.CompilerParams(
            dimension_semantics=("parallel",),
            vmem_limit_bytes=vmem_limit),
    )(patches_packed, w1m, b1m, w2m, b2m, w3m, b3m)

    # unpack lanes -> rows (free), drop padding rows, restore layout.
    out = out_flat.reshape(m_pad, C_out)[:M].reshape(N, Ho, Wo, C_out)
    if channels_last:
        return out.astype(jnp.float32)
    # NCHW + f32 cast fused into one XLA pass to match the PyTorch module.
    return out.transpose(0, 3, 1, 2).astype(jnp.float32)


def _reference_forward(x, params, kernel_size, stride, padding):
    """Pure-JAX f32 reference matching the PyTorch module."""
    w1, b1, w2, b2, w3, b3 = params
    dn = jax.lax.conv_dimension_numbers(x.shape, w1.shape, ("NCHW", "OIHW", "NCHW"))

    def conv(y, w, b, s, p):
        out = jax.lax.conv_general_dilated(
            y, w, window_strides=(s, s), padding=[(p, p), (p, p)],
            dimension_numbers=dn)
        return jax.nn.relu(out + b.reshape(1, -1, 1, 1))

    y = conv(x, w1, b1, stride, padding)
    y = conv(y, w2, b2, 1, 0)
    y = conv(y, w3, b3, 1, 0)
    return y


if __name__ == "__main__":
    # small NiN block: input_channels=4, output_channels=32, kernel_size=3,
    # stride=1, padding=1; input x: (N=2, C=4, H=16, W=16)
    N, C_in, H, W = 2, 4, 16, 16
    C_out, ksize, stride, padding = 32, 3, 1, 1

    key = jax.random.PRNGKey(0)
    k = jax.random.split(key, 7)
    x = jax.random.normal(k[0], (N, C_in, H, W), dtype=jnp.float32)
    w1 = 0.1 * jax.random.normal(k[1], (C_out, C_in, ksize, ksize), dtype=jnp.float32)
    b1 = 0.1 * jax.random.normal(k[2], (C_out,), dtype=jnp.float32)
    w2 = 0.1 * jax.random.normal(k[3], (C_out, C_out, 1, 1), dtype=jnp.float32)
    b2 = 0.1 * jax.random.normal(k[4], (C_out,), dtype=jnp.float32)
    w3 = 0.1 * jax.random.normal(k[5], (C_out, C_out, 1, 1), dtype=jnp.float32)
    b3 = 0.1 * jax.random.normal(k[6], (C_out,), dtype=jnp.float32)
    params = (w1, b1, w2, b2, w3, b3)

    out = nin_block_forward(x, params, ksize, stride, padding)
    out = jax.block_until_ready(out)

    ref = jax.block_until_ready(_reference_forward(x, params, ksize, stride, padding))
    assert out.shape == (N, C_out, H, W), out.shape
    # bf16 matmul inputs + bf16 output store -> relaxed tolerance vs f32 ref
    # (compounded rounding across three conv stages; documented, not a bug).
    max_err = float(jnp.max(jnp.abs(out - ref)))
    assert jnp.allclose(out, ref, atol=3e-2, rtol=3e-2), max_err

    print("KERNEL_OK")
</pallas_src>

<mosaic_0001>
module attributes {stable_mosaic.version = 11 : i64} {
  func.func @_nin_kernel(%arg0: i32, %arg1: memref<64x144xbf16, #tpu.memory_space<vmem>>, %arg2: memref<144x128xbf16, #tpu.memory_space<vmem>>, %arg3: memref<1x128xf32, #tpu.memory_space<vmem>>, %arg4: memref<128x128xbf16, #tpu.memory_space<vmem>>, %arg5: memref<1x128xf32, #tpu.memory_space<vmem>>, %arg6: memref<128x128xbf16, #tpu.memory_space<vmem>>, %arg7: memref<1x128xf32, #tpu.memory_space<vmem>>, %arg8: memref<64x128xbf16, #tpu.memory_space<vmem>>) attributes {dimension_semantics = [#tpu.dimension_semantics<parallel>], iteration_bounds = array<i64: 2>, scalar_prefetch = 0 : i64, scratch_operands = 0 : i64, tpu.core_type = #tpu.core_type<tc>, window_params = [{transform_indices = @transform_0, window_bounds = array<i64: 64, 144>}, {pipeline_mode = #tpu.pipeline_mode<synchronous>, transform_indices = @transform_1, window_bounds = array<i64: 144, 128>}, {pipeline_mode = #tpu.pipeline_mode<synchronous>, transform_indices = @transform_2, window_bounds = array<i64: 1, 128>}, {pipeline_mode = #tpu.pipeline_mode<synchronous>, transform_indices = @transform_3, window_bounds = array<i64: 128, 128>}, {pipeline_mode = #tpu.pipeline_mode<synchronous>, transform_indices = @transform_4, window_bounds = array<i64: 1, 128>}, {pipeline_mode = #tpu.pipeline_mode<synchronous>, transform_indices = @transform_5, window_bounds = array<i64: 128, 128>}, {pipeline_mode = #tpu.pipeline_mode<synchronous>, transform_indices = @transform_6, window_bounds = array<i64: 1, 128>}, {transform_indices = @transform_7, window_bounds = array<i64: 64, 128>}]} {
    %c0 = arith.constant 0 : index
    %c0_0 = arith.constant 0 : index
    %0 = vector.load %arg1[%c0, %c0_0] : memref<64x144xbf16, #tpu.memory_space<vmem>>, vector<64x144xbf16>
    %c0_1 = arith.constant 0 : index
    %c0_2 = arith.constant 0 : index
    %1 = vector.load %arg2[%c0_1, %c0_2] : memref<144x128xbf16, #tpu.memory_space<vmem>>, vector<144x128xbf16>
    %cst = arith.constant dense<0.000000e+00> : vector<64x128xf32>
    %2 = tpu.matmul %0, %1, %cst {dimension_numbers = #tpu.dot_dimension_numbers<[1], [0], [0], [1], [0, 0, 1, 1], [], []>} : vector<64x144xbf16>, vector<144x128xbf16>, vector<64x128xf32> -> vector<64x128xf32>
    %c0_3 = arith.constant 0 : index
    %c0_4 = arith.constant 0 : index
    %3 = vector.load %arg3[%c0_3, %c0_4] : memref<1x128xf32, #tpu.memory_space<vmem>>, vector<1x128xf32>
    %4 = vector.broadcast %3 : vector<1x128xf32> to vector<64x128xf32>
    %5 = arith.addf %2, %4 : vector<64x128xf32>
    %cst_5 = arith.constant 0.000000e+00 : f32
    %6 = vector.broadcast %cst_5 : f32 to vector<64x128xf32>
    %7 = arith.maximumf %5, %6 : vector<64x128xf32>
    %8 = arith.truncf %7 : vector<64x128xf32> to vector<64x128xbf16>
    %c0_6 = arith.constant 0 : index
    %c0_7 = arith.constant 0 : index
    %9 = vector.load %arg4[%c0_6, %c0_7] : memref<128x128xbf16, #tpu.memory_space<vmem>>, vector<128x128xbf16>
    %cst_8 = arith.constant dense<0.000000e+00> : vector<64x128xf32>
    %10 = tpu.matmul %8, %9, %cst_8 {dimension_numbers = #tpu.dot_dimension_numbers<[1], [0], [0], [1], [0, 0, 1, 1], [], []>} : vector<64x128xbf16>, vector<128x128xbf16>, vector<64x128xf32> -> vector<64x128xf32>
    %c0_9 = arith.constant 0 : index
    %c0_10 = arith.constant 0 : index
    %11 = vector.load %arg5[%c0_9, %c0_10] : memref<1x128xf32, #tpu.memory_space<vmem>>, vector<1x128xf32>
    %12 = vector.broadcast %11 : vector<1x128xf32> to vector<64x128xf32>
    %13 = arith.addf %10, %12 : vector<64x128xf32>
    %cst_11 = arith.constant 0.000000e+00 : f32
    %14 = vector.broadcast %cst_11 : f32 to vector<64x128xf32>
    %15 = arith.maximumf %13, %14 : vector<64x128xf32>
    %16 = arith.truncf %15 : vector<64x128xf32> to vector<64x128xbf16>
    %c0_12 = arith.constant 0 : index
    %c0_13 = arith.constant 0 : index
    %17 = vector.load %arg6[%c0_12, %c0_13] : memref<128x128xbf16, #tpu.memory_space<vmem>>, vector<128x128xbf16>
    %cst_14 = arith.constant dense<0.000000e+00> : vector<64x128xf32>
    %18 = tpu.matmul %16, %17, %cst_14 {dimension_numbers = #tpu.dot_dimension_numbers<[1], [0], [0], [1], [0, 0, 1, 1], [], []>} : vector<64x128xbf16>, vector<128x128xbf16>, vector<64x128xf32> -> vector<64x128xf32>
    %c0_15 = arith.constant 0 : index
    %c0_16 = arith.constant 0 : index
    %19 = vector.load %arg7[%c0_15, %c0_16] : memref<1x128xf32, #tpu.memory_space<vmem>>, vector<1x128xf32>
    %20 = vector.broadcast %19 : vector<1x128xf32> to vector<64x128xf32>
    %21 = arith.addf %18, %20 : vector<64x128xf32>
    %cst_17 = arith.constant 0.000000e+00 : f32
    %22 = vector.broadcast %cst_17 : f32 to vector<64x128xf32>
    %23 = arith.maximumf %21, %22 : vector<64x128xf32>
    %24 = arith.truncf %23 : vector<64x128xf32> to vector<64x128xbf16>
    %c0_18 = arith.constant 0 : index
    %c0_19 = arith.constant 0 : index
    %25 = vector.load %arg8[%c0_18, %c0_19] : memref<64x128xbf16, #tpu.memory_space<vmem>>, vector<64x128xbf16>
    tpu.vector_store %arg8[%c0_18, %c0_19], %24 {strides = array<i32>} : memref<64x128xbf16, #tpu.memory_space<vmem>>, vector<64x128xbf16>,
    return
  }
  func.func @transform_0(%arg0: i32) -> (i32, i32) {
    %c0_i32 = arith.constant 0 : i32
    %c0_i32_0 = arith.constant 0 : i32
    return %arg0, %c0_i32 : i32, i32
  }
  func.func @transform_1(%arg0: i32) -> (i32, i32) {
    %c0_i32 = arith.constant 0 : i32
    %c0_i32_0 = arith.constant 0 : i32
    %c0_i32_1 = arith.constant 0 : i32
    return %c0_i32, %c0_i32_0 : i32, i32
  }
  func.func @transform_2(%arg0: i32) -> (i32, i32) {
    %c0_i32 = arith.constant 0 : i32
    %c0_i32_0 = arith.constant 0 : i32
    %c0_i32_1 = arith.constant 0 : i32
    return %c0_i32, %c0_i32_0 : i32, i32
  }
  func.func @transform_3(%arg0: i32) -> (i32, i32) {
    %c0_i32 = arith.constant 0 : i32
    %c0_i32_0 = arith.constant 0 : i32
    %c0_i32_1 = arith.constant 0 : i32
    return %c0_i32, %c0_i32_0 : i32, i32
  }
  func.func @transform_4(%arg0: i32) -> (i32, i32) {
    %c0_i32 = arith.constant 0 : i32
    %c0_i32_0 = arith.constant 0 : i32
    %c0_i32_1 = arith.constant 0 : i32
    return %c0_i32, %c0_i32_0 : i32, i32
  }
  func.func @transform_5(%arg0: i32) -> (i32, i32) {
    %c0_i32 = arith.constant 0 : i32
    %c0_i32_0 = arith.constant 0 : i32
    %c0_i32_1 = arith.constant 0 : i32
    return %c0_i32, %c0_i32_0 : i32, i32
  }
  func.func @transform_6(%arg0: i32) -> (i32, i32) {
    %c0_i32 = arith.constant 0 : i32
    %c0_i32_0 = arith.constant 0 : i32
    %c0_i32_1 = arith.constant 0 : i32
    return %c0_i32, %c0_i32_0 : i32, i32
  }
  func.func @transform_7(%arg0: i32) -> (i32, i32) {
    %c0_i32 = arith.constant 0 : i32
    %c0_i32_0 = arith.constant 0 : i32
    return %arg0, %c0_i32 : i32, i32
  }
}

</mosaic_0001>

<llo_original>
// kernel: tpu_custom_call.1
$region0: #{tpu_custom_call.1}
  #allocation0 [shape = 'u32[]', space=smem, size = 0x4, offset = 0x4, fixed_abs, tag = 'smem constant byte address 0x4 - core index']
  #allocation1 [shape = 'u32[144,128]{1,0:T(1,128)}', space=vmem, size = 0x12000, scoped, tag = 'internal scratch']
  %s0 = inlined_call_operand.vmem [shape: bf16[128,144], index: 0, kind: input, shape index: {}]
  %s1 = inlined_call_operand.vmem [shape: bf16[144,128], index: 1, kind: input, shape index: {}]
  %s2 = inlined_call_operand.vmem [shape: f32[1,128], index: 2, kind: input, shape index: {}]
  %s3 = inlined_call_operand.vmem [shape: bf16[128,128], index: 3, kind: input, shape index: {}]
  %s4 = inlined_call_operand.vmem [shape: f32[1,128], index: 4, kind: input, shape index: {}]
  %s5 = inlined_call_operand.vmem [shape: bf16[128,128], index: 5, kind: input, shape index: {}]
  %s6 = inlined_call_operand.vmem [shape: f32[1,128], index: 6, kind: input, shape index: {}]
  %s7 = inlined_call_operand.hbm [shape: bf16[128,128], index: 7, kind: output, shape index: {}]
  %s8 = sld [smem:[#allocation0]]
  $region61: #{tpu_custom_call.1} parent=0
    _
  %s10 = ssub.s32 1, %s8
  %s11 = scalar_select 0, %s10, %s8
  $region1: #{tpu_custom_call.1} parent=0
    #allocation2 [shape = 'u8[32768]{0}', space=vmem, size = 0x8000, scoped, tag = 'output window, operand 0']
    #allocation3 [shape = 's32[2]{0}', space=sflag, size = 0x8, scoped, tag = 'scoped memory for tpu_custom_call.1']
    %12 = vsyncpa [#allocation3], 0
    %s13 = scalar_lea.sflag [#allocation3], 1
    %14 = vsyncpa %s13, 0
    loop: start=0, step=1, limit=4
    $region2: #{tpu_custom_call.1} parent=1 // loop_pre_header
      _
    $region3: #{tpu_custom_call.1} parent=1 // loop_header
      %s16 = sphi 0, %s20
      %p17 = scmp.ge.s32.totalorder %s16, 4
      %s26 = sphi 0, %s28
      %s29 = sphi 0, %s26
      %s30 = sphi 0, %s29
      %s46 = sphi 0, %s30
      %s50 = sphi 0, %s50
      %s52 = sphi 0, %s50
      %s53 = sphi 0, %s52
      %s67 = sphi 0, %s53
      %s71 = sphi 0, %s71
      %s73 = sphi 0, %s71
      %s74 = sphi 0, %s73
      %s88 = sphi 0, %s74
      %s92 = sphi 0, %s92
      %s94 = sphi 0, %s92
      %s95 = sphi 0, %s94
      %s109 = sphi 0, %s95
      %s113 = sphi 0, %s113
      %s115 = sphi 0, %s113
      %s116 = sphi 0, %s115
      %s130 = sphi 0, %s116
      %s134 = sphi 0, %s134
      %s136 = sphi 0, %s134
      %s137 = sphi 0, %s136
      %s151 = sphi 0, %s137
      %s155 = sphi 0, %s155
      %s157 = sphi 0, %s155
      %s158 = sphi 0, %s157
      %s172 = sphi 0, %s158
      %s178 = sphi 0, %s180
      %s181 = sphi 0, %s178
      %s182 = sphi 0, %s181
      %s198 = sphi 0, %s182
    $region4: #{tpu_custom_call.1} parent=1 // loop_header_branch
      %19 = sbr.rel (%p17) target = $region8
    $region5: #{tpu_custom_call.1} parent=1 // loop_body
      %s21 = ssub.s32 %s16, 1
      %s22 = ssub.s32 %s16, 2
      %s23 = sadd.s32 %s16, 1
      %s24 = ssub.s32 %s16, %s23
      %p25 = scmp.eq.s32.totalorder %s24, 0
      %s27 = sadd.s32 %s26, 1
      %s28 = scalar_select %p25, %s26, %s27
      %p31 = pneg %p25
      %p32 = scmp.eq.s32.totalorder %s16, 1
      %p33 = por %p31, %p32
      %p34 = scmp.ne.s32.totalorder %s26, %s29
      %p35 = scmp.eq.s32.totalorder %s16, 0
      %p36 = por %p34, %p35
      %p37 = scmp.ne.s32.totalorder %s26, %s29
      %p38 = scmp.eq.s32.totalorder %s21, 1
      %p39 = por %p37, %p38
      %p40 = scmp.ne.s32.totalorder %s29, %s30
      %p41 = scmp.eq.s32.totalorder %s21, 0
      %p42 = por %p40, %p41
      %p43 = scmp.ne.s32.totalorder %s29, %s30
      %p44 = scmp.eq.s32.totalorder %s22, 1
      %p45 = por %p43, %p44
      %p47 = scmp.ne.s32.totalorder %s30, %s46
      %p48 = scmp.eq.s32.totalorder %s22, 0
      %p49 = por %p47, %p48
      %s51 = sadd.s32 %s50, 1
      %p54 = scmp.eq.s32.totalorder %s16, 1
      %p55 = scmp.ne.s32.totalorder %s50, %s52
      %p56 = scmp.eq.s32.totalorder %s16, 0
      %p57 = por %p55, %p56
      %p58 = scmp.ne.s32.totalorder %s50, %s52
      %p59 = scmp.eq.s32.totalorder %s21, 1
      %p60 = por %p58, %p59
      %p61 = scmp.ne.s32.totalorder %s52, %s53
      %p62 = scmp.eq.s32.totalorder %s21, 0
      %p63 = por %p61, %p62
      %p64 = scmp.ne.s32.totalorder %s52, %s53
      %p65 = scmp.eq.s32.totalorder %s22, 1
      %p66 = por %p64, %p65
      %p68 = scmp.ne.s32.totalorder %s53, %s67
      %p69 = scmp.eq.s32.totalorder %s22, 0
      %p70 = por %p68, %p69
      %s72 = sadd.s32 %s71, 1
      %p75 = scmp.eq.s32.totalorder %s16, 1
      %p76 = scmp.ne.s32.totalorder %s71, %s73
      %p77 = scmp.eq.s32.totalorder %s16, 0
      %p78 = por %p76, %p77
      %p79 = scmp.ne.s32.totalorder %s71, %s73
      %p80 = scmp.eq.s32.totalorder %s21, 1
      %p81 = por %p79, %p80
      %p82 = scmp.ne.s32.totalorder %s73, %s74
      %p83 = scmp.eq.s32.totalorder %s21, 0
      %p84 = por %p82, %p83
      %p85 = scmp.ne.s32.totalorder %s73, %s74
      %p86 = scmp.eq.s32.totalorder %s22, 1
      %p87 = por %p85, %p86
      %p89 = scmp.ne.s32.totalorder %s74, %s88
      %p90 = scmp.eq.s32.totalorder %s22, 0
      %p91 = por %p89, %p90
      %s93 = sadd.s32 %s92, 1
      %p96 = scmp.eq.s32.totalorder %s16, 1
      %p97 = scmp.ne.s32.totalorder %s92, %s94
      %p98 = scmp.eq.s32.totalorder %s16, 0
      %p99 = por %p97, %p98
      %p100 = scmp.ne.s32.totalorder %s92, %s94
      %p101 = scmp.eq.s32.totalorder %s21, 1
      %p102 = por %p100, %p101
      %p103 = scmp.ne.s32.totalorder %s94, %s95
      %p104 = scmp.eq.s32.totalorder %s21, 0
      %p105 = por %p103, %p104
      %p106 = scmp.ne.s32.totalorder %s94, %s95
      %p107 = scmp.eq.s32.totalorder %s22, 1
      %p108 = por %p106, %p107
      %p110 = scmp.ne.s32.totalorder %s95, %s109
      %p111 = scmp.eq.s32.totalorder %s22, 0
      %p112 = por %p110, %p111
      %s114 = sadd.s32 %s113, 1
      %p117 = scmp.eq.s32.totalorder %s16, 1
      %p118 = scmp.ne.s32.totalorder %s113, %s115
      %p119 = scmp.eq.s32.totalorder %s16, 0
      %p120 = por %p118, %p119
      %p121 = scmp.ne.s32.totalorder %s113, %s115
      %p122 = scmp.eq.s32.totalorder %s21, 1
      %p123 = por %p121, %p122
      %p124 = scmp.ne.s32.totalorder %s115, %s116
      %p125 = scmp.eq.s32.totalorder %s21, 0
      %p126 = por %p124, %p125
      %p127 = scmp.ne.s32.totalorder %s115, %s116
      %p128 = scmp.eq.s32.totalorder %s22, 1
      %p129 = por %p127, %p128
      %p131 = scmp.ne.s32.totalorder %s116, %s130
      %p132 = scmp.eq.s32.totalorder %s22, 0
      %p133 = por %p131, %p132
      %s135 = sadd.s32 %s134, 1
      %p138 = scmp.eq.s32.totalorder %s16, 1
      %p139 = scmp.ne.s32.totalorder %s134, %s136
      %p140 = scmp.eq.s32.totalorder %s16, 0
      %p141 = por %p139, %p140
      %p142 = scmp.ne.s32.totalorder %s134, %s136
      %p143 = scmp.eq.s32.totalorder %s21, 1
      %p144 = por %p142, %p143
      %p145 = scmp.ne.s32.totalorder %s136, %s137
      %p146 = scmp.eq.s32.totalorder %s21, 0
      %p147 = por %p145, %p146
      %p148 = scmp.ne.s32.totalorder %s136, %s137
      %p149 = scmp.eq.s32.totalorder %s22, 1
      %p150 = por %p148, %p149
      %p152 = scmp.ne.s32.totalorder %s137, %s151
      %p153 = scmp.eq.s32.totalorder %s22, 0
      %p154 = por %p152, %p153
      %s156 = sadd.s32 %s155, 1
      %p159 = scmp.eq.s32.totalorder %s16, 1
      %p160 = scmp.ne.s32.totalorder %s155, %s157
      %p161 = scmp.eq.s32.totalorder %s16, 0
      %p162 = por %p160, %p161
      %p163 = scmp.ne.s32.totalorder %s155, %s157
      %p164 = scmp.eq.s32.totalorder %s21, 1
      %p165 = por %p163, %p164
      %p166 = scmp.ne.s32.totalorder %s157, %s158
      %p167 = scmp.eq.s32.totalorder %s21, 0
      %p168 = por %p166, %p167
      %p169 = scmp.ne.s32.totalorder %s157, %s158
      %p170 = scmp.eq.s32.totalorder %s22, 1
      %p171 = por %p169, %p170
      %p173 = scmp.ne.s32.totalorder %s158, %s172
      %p174 = scmp.eq.s32.totalorder %s22, 0
      %p175 = por %p173, %p174
      %s176 = ssub.s32 %s16, %s23
      %p177 = scmp.eq.s32.totalorder %s176, 0
      %s179 = sadd.s32 %s178, 1
      %s180 = scalar_select %p177, %s178, %s179
      %p183 = pneg %p177
      %p184 = scmp.eq.s32.totalorder %s16, 1
      %p185 = por %p183, %p184
      %p186 = scmp.ne.s32.totalorder %s178, %s181
      %p187 = scmp.eq.s32.totalorder %s16, 0
      %p188 = por %p186, %p187
      %p189 = scmp.ne.s32.totalorder %s178, %s181
      %p190 = scmp.eq.s32.totalorder %s21, 1
      %p191 = por %p189, %p190
      %p192 = scmp.ne.s32.totalorder %s181, %s182
      %p193 = scmp.eq.s32.totalorder %s21, 0
      %p194 = por %p192, %p193
      %p195 = scmp.ne.s32.totalorder %s181, %s182
      %p196 = scmp.eq.s32.totalorder %s22, 1
      %p197 = por %p195, %p196
      %p199 = scmp.ne.s32.totalorder %s182, %s198
      %p200 = scmp.eq.s32.totalorder %s22, 0
      %p201 = por %p199, %p200
      %p202 = scmp.le.s32.totalorder 1, %s16
      %p203 = scmp.lt.s32.totalorder %s16, 3
      %p204 = pnand %p202, %p203
      %p205 = pneg %p204
      // Predicated region
      $region9: #{tpu_custom_call.1} parent=5 // pred_check
        _
      $region10: #{tpu_custom_call.1} parent=5 // pred_check_branch
        %207 = sbr.rel (%p204) target = $region12
      $region11: #{tpu_custom_call.1} parent=5 // pred_region
        %s208 = ssub.s32 %s16, 1
        // Predicated region
        $region13: #{tpu_custom_call.1} parent=11 // pred_check
          %p209 = pneg %p63
        $region14: #{tpu_custom_call.1} parent=11 // pred_check_branch
          %211 = sbr.rel (%p209) target = $region16
        $region15: #{tpu_custom_call.1} parent=11 // pred_region
          _
        $region16: #{tpu_custom_call.1} parent=11 // pred_fallthru
          _
        // Predicated region
        $region17: #{tpu_custom_call.1} parent=11 // pred_check
          %p212 = pneg %p84
        $region18: #{tpu_custom_call.1} parent=11 // pred_check_branch
          %214 = sbr.rel (%p212) target = $region20
        $region19: #{tpu_custom_call.1} parent=11 // pred_region
          _
        $region20: #{tpu_custom_call.1} parent=11 // pred_fallthru
          _
        // Predicated region
        $region21: #{tpu_custom_call.1} parent=11 // pred_check
          %p215 = pneg %p105
        $region22: #{tpu_custom_call.1} parent=11 // pred_check_branch
          %217 = sbr.rel (%p215) target = $region24
        $region23: #{tpu_custom_call.1} parent=11 // pred_region
          _
        $region24: #{tpu_custom_call.1} parent=11 // pred_fallthru
          _
        // Predicated region
        $region25: #{tpu_custom_call.1} parent=11 // pred_check
          %p218 = pneg %p126
        $region26: #{tpu_custom_call.1} parent=11 // pred_check_branch
          %220 = sbr.rel (%p218) target = $region28
        $region27: #{tpu_custom_call.1} parent=11 // pred_region
          _
        $region28: #{tpu_custom_call.1} parent=11 // pred_fallthru
          _
        // Predicated region
        $region29: #{tpu_custom_call.1} parent=11 // pred_check
          %p221 = pneg %p147
        $region30: #{tpu_custom_call.1} parent=11 // pred_check_branch
          %223 = sbr.rel (%p221) target = $region32
        $region31: #{tpu_custom_call.1} parent=11 // pred_region
          _
        $region32: #{tpu_custom_call.1} parent=11 // pred_fallthru
          _
        // Predicated region
        $region33: #{tpu_custom_call.1} parent=11 // pred_check
          %p224 = pneg %p168
        $region34: #{tpu_custom_call.1} parent=11 // pred_check_branch
          %226 = sbr.rel (%p224) target = $region36
        $region35: #{tpu_custom_call.1} parent=11 // pred_region
          _
        $region36: #{tpu_custom_call.1} parent=11 // pred_fallthru
          _
      $region12: #{tpu_custom_call.1} parent=5 // pred_fallthru
        _
      %p227 = scmp.lt.s32.totalorder %s16, 2
      // Predicated region
      $region37: #{tpu_custom_call.1} parent=5 // pred_check
        %p228 = pneg %p227
      $region38: #{tpu_custom_call.1} parent=5 // pred_check_branch
        %230 = sbr.rel (%p228) target = $region40
      $region39: #{tpu_custom_call.1} parent=5 // pred_region
        // Predicated region
        $region41: #{tpu_custom_call.1} parent=39 // pred_check
          %p231 = pneg %p36
        $region42: #{tpu_custom_call.1} parent=39 // pred_check_branch
          %233 = sbr.rel (%p231) target = $region44
        $region43: #{tpu_custom_call.1} parent=39 // pred_region
          %s234 = smul.u32 8, %s16
          %p235 = scmp.lt.s32.totalorder %s234, 15
          %s236 = scalar_select %p235, %s234, 15
          %s237 = smul.addr %s236, 2
          %s238 = smul.addr %s237, 4
          %s239 = scalar_lea.vmem %s0, %s238
          %s240 = smul.u32 8, %s16
        $region44: #{tpu_custom_call.1} parent=39 // pred_fallthru
          _
      $region40: #{tpu_custom_call.1} parent=5 // pred_fallthru
        _
      %p241 = scmp.le.s32.totalorder 1, %s16
      %p242 = scmp.lt.s32.totalorder %s16, 3
      %p243 = pnand %p241, %p242
      %p244 = pneg %p243
      // Predicated region
      $region45: #{tpu_custom_call.1} parent=5 // pred_check
        _
      $region46: #{tpu_custom_call.1} parent=5 // pred_check_branch
        %246 = sbr.rel (%p243) target = $region48
      $region47: #{tpu_custom_call.1} parent=5 // pred_region
        %s247 = ssub.s32 %s16, 1
        %s248 = smul.u32 8, %s21
        %p249 = scmp.lt.s32.totalorder %s248, 15
        %s250 = scalar_select %p249, %s248, 15
        %s251 = smul.addr %s250, 2
        %s252 = smul.addr %s251, 4
        %s253 = scalar_lea.vmem %s0, %s252
        %p254 = pneg %p42
        %p255 = pneg %p39
        %p256 = pneg %p63
        %p257 = pneg %p60
        %p258 = pneg %p84
        %p259 = pneg %p81
        %p260 = pneg %p105
        %p261 = pneg %p102
        %p262 = pneg %p126
        %p263 = pneg %p123
        %p264 = pneg %p147
        %p265 = pneg %p144
        %p266 = pneg %p168
        %p267 = pneg %p165
        %p268 = pneg %p194
        %p269 = pneg %p191
        %s270 = sand.u32 %s181, 1
        %s271 = scalar_lea.sflag [#allocation3], %s270
        %s272 = sand.u32 %s181, 1
        %s273 = smul.addr %s272, 32
        %s274 = scalar_lea.vmem [#allocation2], %s273
        %s275 = smul.u32 8, %s21
        %p276 = scmp.lt.s32.totalorder %s275, 15
        %s277 = scalar_select %p276, %s275, 15
        %s278 = smul.addr %s277, 2
        %s279 = smul.addr %s278, 4
        %s280 = scalar_lea.vmem %s0, %s279
        %s281 = smul.u32 8, %s21
        %s282 = smul.u32 8, %s21
        %v284 = vld [vmem:[%s280] sm:$0xff]
        %v285 = vld [vmem:[%s280 + $0x8] sm:$0xff]
        %v286 = vld [vmem:[%s280 + $0x10] sm:$0xff]
        %v287 = vld [vmem:[%s280 + $0x18] sm:$0xff]
        %v288 = vld [vmem:[%s280 + $0x20] sm:$0xff]
        %v289 = vld [vmem:[%s280 + $0x28] sm:$0xff]
        %v290 = vld [vmem:[%s280 + $0x30] sm:$0xff]
        %v291 = vld [vmem:[%s280 + $0x38] sm:$0xff]
        %v292 = vld [vmem:[%s1] sm:$0xf]
        %v293 = vld [vmem:[%s1 + $0x4] sm:$0xf]
        %v294 = vld [vmem:[%s1 + $0x8] sm:$0xf]
        %v295 = vld [vmem:[%s1 + $0xc] sm:$0xf]
        %v296 = vld [vmem:[%s1 + $0x10] sm:$0xf]
        %v297 = vld [vmem:[%s1 + $0x14] sm:$0xf]
        %v298 = vld [vmem:[%s1 + $0x18] sm:$0xf]
        %v299 = vld [vmem:[%s1 + $0x1c] sm:$0xf]
        %v300 = vld [vmem:[%s1 + $0x20] sm:$0xf]
        %v301 = vld [vmem:[%s1 + $0x24] sm:$0xf]
        %v302 = vld [vmem:[%s1 + $0x28] sm:$0xf]
        %v303 = vld [vmem:[%s1 + $0x2c] sm:$0xf]
        %v304 = vld [vmem:[%s1 + $0x30] sm:$0xf]
        %v305 = vld [vmem:[%s1 + $0x34] sm:$0xf]
        %v306 = vld [vmem:[%s1 + $0x38] sm:$0xf]
        %v307 = vld [vmem:[%s1 + $0x3c] sm:$0xf]
        %v308 = vld [vmem:[%s1 + $0x40] sm:$0xf]
        %v309 = vld [vmem:[%s1 + $0x44] sm:$0xf]
        %v310 = vld [vmem:[%s2] sm:$0x1]
        %v312 = vlaneseq
        %v313 = vshrl.u32 %v312, 7
        %v314 = vsub.s32 0, %v313
        %v315 = vrot.slane %v310, %v314
        %v325 = vunpack.c.l.b16 %v284
        %v326 = vunpack.c.h.b16 %v284
        %v327 = vunpack.c.l.b16 %v285
        %v328 = vunpack.c.h.b16 %v285
        %v329 = vunpack.c.l.b16 %v286
        %v330 = vunpack.c.h.b16 %v286
        %v331 = vunpack.c.l.b16 %v287
        %v332 = vunpack.c.h.b16 %v287
        %v333 = vunpack.c.l.b16 %v288
        %v334 = vunpack.c.h.b16 %v288
        %v335 = vunpack.c.l.b16 %v289
        %v336 = vunpack.c.h.b16 %v289
        %v337 = vunpack.c.l.b16 %v290
        %v338 = vunpack.c.h.b16 %v290
        %v339 = vunpack.c.l.b16 %v291
        %v340 = vunpack.c.h.b16 %v291
        %v341 = vpack.c.b16 %v327, %v325
        %v342 = vpack.c.b16 %v328, %v326
        %v343 = vpack.c.b16 %v331, %v329
        %v344 = vpack.c.b16 %v332, %v330
        %v345 = vpack.c.b16 %v335, %v333
        %v346 = vpack.c.b16 %v336, %v334
        %v347 = vpack.c.b16 %v339, %v337
        %v348 = vpack.c.b16 %v340, %v338
        %v371 = vunpack.c.l.b16 %v292
        %v372 = vunpack.c.l.b16 %v293
        %v373 = vunpack.c.l.b16 %v294
        %v374 = vunpack.c.l.b16 %v295
        %v375 = vunpack.c.l.b16 %v296
        %v376 = vunpack.c.l.b16 %v297
        %v377 = vunpack.c.l.b16 %v298
        %v378 = vunpack.c.l.b16 %v299
        %v379 = vunpack.c.l.b16 %v300
        %v380 = vunpack.c.l.b16 %v301
        %v381 = vunpack.c.l.b16 %v302
        %v382 = vunpack.c.l.b16 %v303
        %v383 = vunpack.c.l.b16 %v304
        %v384 = vunpack.c.l.b16 %v305
        %v385 = vunpack.c.l.b16 %v306
        %v386 = vunpack.c.l.b16 %v307
        %v387 = vunpack.c.l.b16 %v308
        %v388 = vunpack.c.l.b16 %v309
        %v389 = vpack.c.b16 %v372, %v371
        %v390 = vpack.c.b16 %v374, %v373
        %v391 = vpack.c.b16 %v376, %v375
        %v392 = vpack.c.b16 %v378, %v377
        %v393 = vpack.c.b16 %v380, %v379
        %v394 = vpack.c.b16 %v382, %v381
        %v395 = vpack.c.b16 %v384, %v383
        %v396 = vpack.c.b16 %v386, %v385
        %v397 = vpack.c.b16 %v388, %v387
        %vm407 = vcmask 130048
        %v409 = vsel %vm407, %v342, 0
        %v412 = vsel %vm407, %v344, 0
        %v415 = vsel %vm407, %v346, 0
        %v418 = vsel %vm407, %v348, 0
        %420 = vmatprep.subr.bf16.mxu0 0
        %421 = vmatpush1.bf16.msra.mxu0 %v396
        %422 = vmatprep.subr.bf16.mxu0 0
        %423 = vmatpush1.bf16.msra.mxu0 %v395
        %424 = vmatprep.subr.bf16.mxu0 0
        %425 = vmatpush1.bf16.msra.mxu0 %v394
        %426 = vmatprep.subr.bf16.mxu0 0
        %427 = vmatpush1.bf16.msra.mxu0 %v393
        %428 = vmatprep.subr.bf16.mxu0 0
        %429 = vmatpush1.bf16.msra.mxu0 %v392
        %430 = vmatprep.subr.bf16.mxu0 0
        %431 = vmatpush1.bf16.msra.mxu0 %v391
        %432 = vmatprep.subr.bf16.mxu0 0
        %433 = vmatpush1.bf16.msra.mxu0 %v390
        %434 = vmatprep.subr.bf16.mxu0 0
        %435 = vmatpush1.bf16.msra.mxu0 %v389
        %436 = vmatprep.subr.bf16.mxu0 0
        %437 = vmatpush2.bf16.msra.mxu0 0
        %438 = vmatprep.subr.bf16.mxu0 0
        %439 = vmatpush2.bf16.msra.mxu0 0
        %440 = vmatprep.subr.bf16.mxu0 0
        %441 = vmatpush2.bf16.msra.mxu0 0
        %442 = vmatprep.subr.bf16.mxu0 0
        %443 = vmatpush2.bf16.msra.mxu0 0
        %444 = vmatprep.subr.bf16.mxu0 0
        %445 = vmatpush2.bf16.msra.mxu0 0
        %446 = vmatprep.subr.bf16.mxu0 0
        %447 = vmatpush2.bf16.msra.mxu0 0
        %448 = vmatprep.subr.bf16.mxu0 0
        %449 = vmatpush2.bf16.msra.mxu0 0
        %450 = vmatprep.subr.bf16.mxu0 0
        %451 = vmatpush2.bf16.msra.mxu0 %v397
        %452 = vmatprep.mubr.bf16.mxu0 %v409
        %453 = vmatmul.mubr.bf16.gmra.mxu0 %v341
        %v454 = vpop.f32.mrf.mxu0
        %v455 = vadd.f32 %v315, %v454
        %v456 = vpop.f32.mrf.mxu0
        %v457 = vpop.f32.mrf.mxu0
        %v458 = vadd.f32 %v315, %v457
        %v459 = vpop.f32.mrf.mxu0
        %460 = vmatprep.mubr.bf16.mxu0 %v412
        %461 = vmatmul.mubr.bf16.gmra.mxu0 %v343
        %v462 = vpop.f32.mrf.mxu0
        %v463 = vadd.f32 %v315, %v462
        %v464 = vpop.f32.mrf.mxu0
        %v465 = vpop.f32.mrf.mxu0
        %v466 = vadd.f32 %v315, %v465
        %v467 = vpop.f32.mrf.mxu0
        %468 = vmatprep.mubr.bf16.mxu0 %v415
        %469 = vmatmul.mubr.bf16.gmra.mxu0 %v345
        %v470 = vpop.f32.mrf.mxu0
        %v471 = vadd.f32 %v315, %v470
        %v472 = vpop.f32.mrf.mxu0
        %v473 = vpop.f32.mrf.mxu0
        %v474 = vadd.f32 %v315, %v473
        %v475 = vpop.f32.mrf.mxu0
        %476 = vmatprep.mubr.bf16.mxu0 %v418
        %477 = vmatmul.mubr.bf16.gmra.mxu0 %v347
        %v478 = vpop.f32.mrf.mxu0
        %v479 = vadd.f32 %v315, %v478
        %v480 = vpop.f32.mrf.mxu0
        %v481 = vpop.f32.mrf.mxu0
        %v482 = vadd.f32 %v315, %v481
        %v483 = vpop.f32.mrf.mxu0
        %484 = vdwg.mxu0
        %v485 = vmax.f32 %v455, 0.0
        %v486 = vmax.f32 %v458, 0.0
        %v487 = vmax.f32 %v463, 0.0
        %v488 = vmax.f32 %v466, 0.0
        %v489 = vmax.f32 %v471, 0.0
        %v490 = vmax.f32 %v474, 0.0
        %v491 = vmax.f32 %v479, 0.0
        %v492 = vmax.f32 %v482, 0.0
        %v493 = vpack.c.bf16 %v486, %v485
        %v494 = vpack.c.bf16 %v488, %v487
        %v495 = vpack.c.bf16 %v490, %v489
        %v496 = vpack.c.bf16 %v492, %v491
        %v497 = vld [vmem:[%s3] sm:$0xf]
        %v498 = vld [vmem:[%s3 + $0x4] sm:$0xf]
        %v499 = vld [vmem:[%s3 + $0x8] sm:$0xf]
        %v500 = vld [vmem:[%s3 + $0xc] sm:$0xf]
        %v501 = vld [vmem:[%s3 + $0x10] sm:$0xf]
        %v502 = vld [vmem:[%s3 + $0x14] sm:$0xf]
        %v503 = vld [vmem:[%s3 + $0x18] sm:$0xf]
        %v504 = vld [vmem:[%s3 + $0x1c] sm:$0xf]
        %v505 = vld [vmem:[%s3 + $0x20] sm:$0xf]
        %v506 = vld [vmem:[%s3 + $0x24] sm:$0xf]
        %v507 = vld [vmem:[%s3 + $0x28] sm:$0xf]
        %v508 = vld [vmem:[%s3 + $0x2c] sm:$0xf]
        %v509 = vld [vmem:[%s3 + $0x30] sm:$0xf]
        %v510 = vld [vmem:[%s3 + $0x34] sm:$0xf]
        %v511 = vld [vmem:[%s3 + $0x38] sm:$0xf]
        %v512 = vld [vmem:[%s3 + $0x3c] sm:$0xf]
        %v513 = vld [vmem:[%s4] sm:$0x1]
        %v515 = vlaneseq
        %v516 = vshrl.u32 %v515, 7
        %v517 = vsub.s32 0, %v516
        %v518 = vrot.slane %v513, %v517
        %v536 = vunpack.c.l.b16 %v497
        %v537 = vunpack.c.l.b16 %v498
        %v538 = vunpack.c.l.b16 %v499
        %v539 = vunpack.c.l.b16 %v500
        %v540 = vunpack.c.l.b16 %v501
        %v541 = vunpack.c.l.b16 %v502
        %v542 = vunpack.c.l.b16 %v503
        %v543 = vunpack.c.l.b16 %v504
        %v544 = vunpack.c.l.b16 %v505
        %v545 = vunpack.c.l.b16 %v506
        %v546 = vunpack.c.l.b16 %v507
        %v547 = vunpack.c.l.b16 %v508
        %v548 = vunpack.c.l.b16 %v509
        %v549 = vunpack.c.l.b16 %v510
        %v550 = vunpack.c.l.b16 %v511
        %v551 = vunpack.c.l.b16 %v512
        %v552 = vpack.c.b16 %v537, %v536
        %v553 = vpack.c.b16 %v539, %v538
        %v554 = vpack.c.b16 %v541, %v540
        %v555 = vpack.c.b16 %v543, %v542
        %v556 = vpack.c.b16 %v545, %v544
        %v557 = vpack.c.b16 %v547, %v546
        %v558 = vpack.c.b16 %v549, %v548
        %v559 = vpack.c.b16 %v551, %v550
        %568 = vmatprep.subr.bf16.mxu0 0
        %569 = vmatpush1.bf16.msra.mxu0 %v559
        %570 = vmatprep.subr.bf16.mxu0 0
        %571 = vmatpush1.bf16.msra.mxu0 %v558
        %572 = vmatprep.subr.bf16.mxu0 0
        %573 = vmatpush1.bf16.msra.mxu0 %v557
        %574 = vmatprep.subr.bf16.mxu0 0
        %575 = vmatpush1.bf16.msra.mxu0 %v556
        %576 = vmatprep.subr.bf16.mxu0 0
        %577 = vmatpush1.bf16.msra.mxu0 %v555
        %578 = vmatprep.subr.bf16.mxu0 0
        %579 = vmatpush1.bf16.msra.mxu0 %v554
        %580 = vmatprep.subr.bf16.mxu0 0
        %581 = vmatpush1.bf16.msra.mxu0 %v553
        %582 = vmatprep.subr.bf16.mxu0 0
        %583 = vmatpush1.bf16.msra.mxu0 %v552
        %584 = vmatprep.subr.bf16.mxu0 0
        %585 = vmatpush2.bf16.msra.mxu0 0
        %586 = vmatprep.subr.bf16.mxu0 0
        %587 = vmatpush2.bf16.msra.mxu0 0
        %588 = vmatprep.subr.bf16.mxu0 0
        %589 = vmatpush2.bf16.msra.mxu0 0
        %590 = vmatprep.subr.bf16.mxu0 0
        %591 = vmatpush2.bf16.msra.mxu0 0
        %592 = vmatprep.subr.bf16.mxu0 0
        %593 = vmatpush2.bf16.msra.mxu0 0
        %594 = vmatprep.subr.bf16.mxu0 0
        %595 = vmatpush2.bf16.msra.mxu0 0
        %596 = vmatprep.subr.bf16.mxu0 0
        %597 = vmatpush2.bf16.msra.mxu0 0
        %598 = vmatprep.subr.bf16.mxu0 0
        %599 = vmatpush2.bf16.msra.mxu0 0
        %600 = vmatprep.mubr.bf16.mxu0 0
        %601 = vmatmul.mubr.bf16.gmra.mxu0 %v493
        %v602 = vpop.f32.mrf.mxu0
        %v603 = vadd.f32 %v518, %v602
        %v604 = vpop.f32.mrf.mxu0
        %v605 = vpop.f32.mrf.mxu0
        %v606 = vadd.f32 %v518, %v605
        %v607 = vpop.f32.mrf.mxu0
        %608 = vmatprep.mubr.bf16.mxu0 0
        %609 = vmatmul.mubr.bf16.gmra.mxu0 %v494
        %v610 = vpop.f32.mrf.mxu0
        %v611 = vadd.f32 %v518, %v610
        %v612 = vpop.f32.mrf.mxu0
        %v613 = vpop.f32.mrf.mxu0
        %v614 = vadd.f32 %v518, %v613
        %v615 = vpop.f32.mrf.mxu0
        %616 = vmatprep.mubr.bf16.mxu0 0
        %617 = vmatmul.mubr.bf16.gmra.mxu0 %v495
        %v618 = vpop.f32.mrf.mxu0
        %v619 = vadd.f32 %v518, %v618
        %v620 = vpop.f32.mrf.mxu0
        %v621 = vpop.f32.mrf.mxu0
        %v622 = vadd.f32 %v518, %v621
        %v623 = vpop.f32.mrf.mxu0
        %624 = vmatprep.mubr.bf16.mxu0 0
        %625 = vmatmul.mubr.bf16.gmra.mxu0 %v496
        %v626 = vpop.f32.mrf.mxu0
        %v627 = vadd.f32 %v518, %v626
        %v628 = vpop.f32.mrf.mxu0
        %v629 = vpop.f32.mrf.mxu0
        %v630 = vadd.f32 %v518, %v629
        %v631 = vpop.f32.mrf.mxu0
        %632 = vdwg.mxu0
        %v633 = vmax.f32 %v603, 0.0
        %v634 = vmax.f32 %v606, 0.0
        %v635 = vmax.f32 %v611, 0.0
        %v636 = vmax.f32 %v614, 0.0
        %v637 = vmax.f32 %v619, 0.0
        %v638 = vmax.f32 %v622, 0.0
        %v639 = vmax.f32 %v627, 0.0
        %v640 = vmax.f32 %v630, 0.0
        %v641 = vpack.c.bf16 %v634, %v633
        %v642 = vpack.c.bf16 %v636, %v635
        %v643 = vpack.c.bf16 %v638, %v637
        %v644 = vpack.c.bf16 %v640, %v639
        %v645 = vld [vmem:[%s5] sm:$0xf]
        %v646 = vld [vmem:[%s5 + $0x4] sm:$0xf]
        %v647 = vld [vmem:[%s5 + $0x8] sm:$0xf]
        %v648 = vld [vmem:[%s5 + $0xc] sm:$0xf]
        %v649 = vld [vmem:[%s5 + $0x10] sm:$0xf]
        %v650 = vld [vmem:[%s5 + $0x14] sm:$0xf]
        %v651 = vld [vmem:[%s5 + $0x18] sm:$0xf]
        %v652 = vld [vmem:[%s5 + $0x1c] sm:$0xf]
        %v653 = vld [vmem:[%s5 + $0x20] sm:$0xf]
        %v654 = vld [vmem:[%s5 + $0x24] sm:$0xf]
        %v655 = vld [vmem:[%s5 + $0x28] sm:$0xf]
        %v656 = vld [vmem:[%s5 + $0x2c] sm:$0xf]
        %v657 = vld [vmem:[%s5 + $0x30] sm:$0xf]
        %v658 = vld [vmem:[%s5 + $0x34] sm:$0xf]
        %v659 = vld [vmem:[%s5 + $0x38] sm:$0xf]
        %v660 = vld [vmem:[%s5 + $0x3c] sm:$0xf]
        %v661 = vld [vmem:[%s6] sm:$0x1]
        %v663 = vlaneseq
        %v664 = vshrl.u32 %v663, 7
        %v665 = vsub.s32 0, %v664
        %v666 = vrot.slane %v661, %v665
        %v684 = vunpack.c.l.b16 %v645
        %v685 = vunpack.c.l.b16 %v646
        %v686 = vunpack.c.l.b16 %v647
        %v687 = vunpack.c.l.b16 %v648
        %v688 = vunpack.c.l.b16 %v649
        %v689 = vunpack.c.l.b16 %v650
        %v690 = vunpack.c.l.b16 %v651
        %v691 = vunpack.c.l.b16 %v652
        %v692 = vunpack.c.l.b16 %v653
        %v693 = vunpack.c.l.b16 %v654
        %v694 = vunpack.c.l.b16 %v655
        %v695 = vunpack.c.l.b16 %v656
        %v696 = vunpack.c.l.b16 %v657
        %v697 = vunpack.c.l.b16 %v658
        %v698 = vunpack.c.l.b16 %v659
        %v699 = vunpack.c.l.b16 %v660
        %v700 = vpack.c.b16 %v685, %v684
        %v701 = vpack.c.b16 %v687, %v686
        %v702 = vpack.c.b16 %v689, %v688
        %v703 = vpack.c.b16 %v691, %v690
        %v704 = vpack.c.b16 %v693, %v692
        %v705 = vpack.c.b16 %v695, %v694
        %v706 = vpack.c.b16 %v697, %v696
        %v707 = vpack.c.b16 %v699, %v698
        %716 = vmatprep.subr.bf16.mxu0 0
        %717 = vmatpush1.bf16.msra.mxu0 %v707
        %718 = vmatprep.subr.bf16.mxu0 0
        %719 = vmatpush1.bf16.msra.mxu0 %v706
        %720 = vmatprep.subr.bf16.mxu0 0
        %721 = vmatpush1.bf16.msra.mxu0 %v705
        %722 = vmatprep.subr.bf16.mxu0 0
        %723 = vmatpush1.bf16.msra.mxu0 %v704
        %724 = vmatprep.subr.bf16.mxu0 0
        %725 = vmatpush1.bf16.msra.mxu0 %v703
        %726 = vmatprep.subr.bf16.mxu0 0
        %727 = vmatpush1.bf16.msra.mxu0 %v702
        %728 = vmatprep.subr.bf16.mxu0 0
        %729 = vmatpush1.bf16.msra.mxu0 %v701
        %730 = vmatprep.subr.bf16.mxu0 0
        %731 = vmatpush1.bf16.msra.mxu0 %v700
        %732 = vmatprep.subr.bf16.mxu0 0
        %733 = vmatpush2.bf16.msra.mxu0 0
        %734 = vmatprep.subr.bf16.mxu0 0
        %735 = vmatpush2.bf16.msra.mxu0 0
        %736 = vmatprep.subr.bf16.mxu0 0
        %737 = vmatpush2.bf16.msra.mxu0 0
        %738 = vmatprep.subr.bf16.mxu0 0
        %739 = vmatpush2.bf16.msra.mxu0 0
        %740 = vmatprep.subr.bf16.mxu0 0
        %741 = vmatpush2.bf16.msra.mxu0 0
        %742 = vmatprep.subr.bf16.mxu0 0
        %743 = vmatpush2.bf16.msra.mxu0 0
        %744 = vmatprep.subr.bf16.mxu0 0
        %745 = vmatpush2.bf16.msra.mxu0 0
        %746 = vmatprep.subr.bf16.mxu0 0
        %747 = vmatpush2.bf16.msra.mxu0 0
        %748 = vmatprep.mubr.bf16.mxu0 0
        %749 = vmatmul.mubr.bf16.gmra.mxu0 %v641
        %v750 = vpop.f32.mrf.mxu0
        %v751 = vadd.f32 %v666, %v750
        %v752 = vpop.f32.mrf.mxu0
        %v753 = vpop.f32.mrf.mxu0
        %v754 = vadd.f32 %v666, %v753
        %v755 = vpop.f32.mrf.mxu0
        %756 = vmatprep.mubr.bf16.mxu0 0
        %757 = vmatmul.mubr.bf16.gmra.mxu0 %v642
        %v758 = vpop.f32.mrf.mxu0
        %v759 = vadd.f32 %v666, %v758
        %v760 = vpop.f32.mrf.mxu0
        %v761 = vpop.f32.mrf.mxu0
        %v762 = vadd.f32 %v666, %v761
        %v763 = vpop.f32.mrf.mxu0
        %764 = vmatprep.mubr.bf16.mxu0 0
        %765 = vmatmul.mubr.bf16.gmra.mxu0 %v643
        %v766 = vpop.f32.mrf.mxu0
        %v767 = vadd.f32 %v666, %v766
        %v768 = vpop.f32.mrf.mxu0
        %v769 = vpop.f32.mrf.mxu0
        %v770 = vadd.f32 %v666, %v769
        %v771 = vpop.f32.mrf.mxu0
        %772 = vmatprep.mubr.bf16.mxu0 0
        %773 = vmatmul.mubr.bf16.gmra.mxu0 %v644
        %v774 = vpop.f32.mrf.mxu0
        %v775 = vadd.f32 %v666, %v774
        %v776 = vpop.f32.mrf.mxu0
        %v777 = vpop.f32.mrf.mxu0
        %v778 = vadd.f32 %v666, %v777
        %v779 = vpop.f32.mrf.mxu0
        %780 = vdwg.mxu0
        %v781 = vmax.f32 %v751, 0.0
        %v782 = vmax.f32 %v754, 0.0
        %v783 = vmax.f32 %v759, 0.0
        %v784 = vmax.f32 %v762, 0.0
        %v785 = vmax.f32 %v767, 0.0
        %v786 = vmax.f32 %v770, 0.0
        %v787 = vmax.f32 %v775, 0.0
        %v788 = vmax.f32 %v778, 0.0
        %v789 = vpack.c.bf16 %v782, %v781
        %v790 = vpack.c.bf16 %v784, %v783
        %v791 = vpack.c.bf16 %v786, %v785
        %v792 = vpack.c.bf16 %v788, %v787
        %v797 = vunpack.c.l.b16 %v789
        %v798 = vunpack.c.h.b16 %v789
        %v799 = vunpack.c.l.b16 %v790
        %v800 = vunpack.c.h.b16 %v790
        %v801 = vunpack.c.l.b16 %v791
        %v802 = vunpack.c.h.b16 %v791
        %v803 = vunpack.c.l.b16 %v792
        %v804 = vunpack.c.h.b16 %v792
        %v805 = vpack.c.b16 %v797, %v797
        %v806 = vpack.c.b16 %v798, %v798
        %v807 = vpack.c.b16 %v799, %v799
        %v808 = vpack.c.b16 %v800, %v800
        %v809 = vpack.c.b16 %v801, %v801
        %v810 = vpack.c.b16 %v802, %v802
        %v811 = vpack.c.b16 %v803, %v803
        %v812 = vpack.c.b16 %v804, %v804
        %821 = vst [vmem:[%s274] sm:$0xf] %v805
        %822 = vst [vmem:[%s274 + $0x4] sm:$0xf] %v806
        %823 = vst [vmem:[%s274 + $0x8] sm:$0xf] %v807
        %824 = vst [vmem:[%s274 + $0xc] sm:$0xf] %v808
        %825 = vst [vmem:[%s274 + $0x10] sm:$0xf] %v809
        %826 = vst [vmem:[%s274 + $0x14] sm:$0xf] %v810
        %827 = vst [vmem:[%s274 + $0x18] sm:$0xf] %v811
        %828 = vst [vmem:[%s274 + $0x1c] sm:$0xf] %v812
        %s829 = sand.u32 %s181, 1
        %s830 = scalar_lea.sflag [#allocation3], %s829
        %s831 = sand.u32 %s181, 1
        %s832 = smul.addr %s831, 32
        %s833 = scalar_lea.vmem [#allocation2], %s832
        // Predicated region
        $region49: #{tpu_custom_call.1} parent=47 // pred_check
          %p834 = pneg %p191
        $region50: #{tpu_custom_call.1} parent=47 // pred_check_branch
          %836 = sbr.rel (%p834) target = $region52
        $region51: #{tpu_custom_call.1} parent=47 // pred_region
          %s837 = smul.u32 8, %s21
          %s839 = ssub.s32 512, 512
          %840 = vsyncadd %s830, %s839
          %s841 = smul.addr %s837, 64
          %s842 = scalar_lea.hbm %s7, %s841
          %s843 = sshll.u32 %s833, 4
          %s844 = int_to_ptr.vmem [resolvable:$true] %s843
          %849 = dma.vmem_to_hbm [thread:$0]  %s844, 512, %s842, %s830, 64, 64, 4
        $region52: #{tpu_custom_call.1} parent=47 // pred_fallthru
          _
      $region48: #{tpu_custom_call.1} parent=5 // pred_fallthru
        _
      %p850 = scmp.le.s32.totalorder 2, %s16
      // Predicated region
      $region53: #{tpu_custom_call.1} parent=5 // pred_check
        %p851 = pneg %p850
      $region54: #{tpu_custom_call.1} parent=5 // pred_check_branch
        %853 = sbr.rel (%p851) target = $region56
      $region55: #{tpu_custom_call.1} parent=5 // pred_region
        %s854 = ssub.s32 %s16, 2
        // Predicated region
        $region57: #{tpu_custom_call.1} parent=55 // pred_check
          %p855 = pneg %p197
        $region58: #{tpu_custom_call.1} parent=55 // pred_check_branch
          %857 = sbr.rel (%p855) target = $region60
        $region59: #{tpu_custom_call.1} parent=55 // pred_region
          %s858 = sand.u32 %s182, 1
          %s859 = scalar_lea.sflag [#allocation3], %s858
          %s860 = sand.u32 %s182, 1
          %s861 = smul.addr %s860, 32
          %s862 = scalar_lea.vmem [#allocation2], %s861
          %863 = dma.done %s859, 512
        $region60: #{tpu_custom_call.1} parent=55 // pred_fallthru
          _
      $region56: #{tpu_custom_call.1} parent=5 // pred_fallthru
        _
    $region6: #{tpu_custom_call.1} parent=1 // loop_footer
      %s20 = sadd.s32 1, %s16
    $region7: #{tpu_custom_call.1} parent=1 // loop_footer_branch
      %15 = sbr.rel target = $region3
    $region8: #{tpu_custom_call.1} parent=1 // loop_exit
      _
    %864 = vsyncpa [#allocation3], 1
    %s865 = scalar_lea.sflag [#allocation3], 1
    %866 = vsyncpa %s865, 1

</llo_original>
